<compile_context>
chip_gen: v7x
topology: tpu7x:2x2x1
jax: 0.10.0
libtpu: 0.0.40
codegen_flags: <defaults>
</compile_context>

<pallas_src>
import functools

import jax
import jax.numpy as jnp
from jax.experimental import pallas as pl
from jax.experimental.pallas import tpu as pltpu

GAMMA = 2.0
EPS = 1e-8  # used only by the pure-JAX reference (kernel drops it; < ulp effect)


def _focal_loss_kernel(x_ref, t_ref, pw_ref, out_ref, *,
                       n_rows, tile_rows, gamma, need_mask):
    i = pl.program_id(0)

    x = x_ref[...].astype(jnp.float32)    # (tile_rows, C) logits
    t = t_ref[...].astype(jnp.float32)    # (tile_rows, C) targets in {0, 1}
    pw = pw_ref[...].astype(jnp.float32)  # (1, C) pos_weight, broadcast over rows

    # softplus(x) = max(x, 0) + log1p(exp(-|x|))      (1 exp + 1 log1p, stable)
    sp = jnp.maximum(x, 0.0) + jnp.log1p(jnp.exp(-jnp.abs(x)))
    one_minus_t = 1.0 - t

    # BCEWithLogitsLoss(reduction='none', pos_weight=pw):
    #   pw * t * softplus(-x) + (1 - t) * softplus(x),   softplus(-x) = sp - x
    bce = pw * (t * (sp - x)) + one_minus_t * sp

    # Focal factor in log space (hard {0,1} labels, matching the module's
    # `targets == 1` semantics):  1 - pt = exp((1-t)*x - sp)
    #   -> (1 - pt)**gamma = exp(gamma * ((1-t)*x - sp))      (1 exp, no pow)
    u = one_minus_t * x - sp
    loss = jnp.exp(gamma * u) * bce

    C = loss.shape[1]

    def _reduce(v):
        # (tile, C) -> (8, C) partial sums: sublane-group adds, pure VPU,
        # reshape stays a view because tile is a multiple of 8.
        return v.reshape(tile_rows // 8, 8, C).sum(axis=0)

    if need_mask:
        last = pl.num_programs(0) - 1

        @pl.when(i != last)
        def _():
            out_ref[...] = _reduce(loss)

        @pl.when(i == last)
        def _():
            # Zero the rows past B in the ragged last block (reads there are
            # undefined; jnp.where selects 0 so NaN/Inf garbage cannot leak).
            row = i * tile_rows + jax.lax.broadcasted_iota(
                jnp.int32, loss.shape, 0)
            out_ref[...] = _reduce(jnp.where(row < n_rows, loss, 0.0))
    else:
        out_ref[...] = _reduce(loss)


def _sublane_multiple(dtype):
    nbytes = jnp.dtype(dtype).itemsize
    return max(8, 32 // max(1, nbytes))   # 8 for 4B, 16 for 2B, 32 for 1B


def focal_loss(inputs, targets, pos_weight=None, gamma=GAMMA,
               reduction="mean", tile_rows=None):
    """Pallas implementation of FocalLoss.forward (reduction='mean' or 'sum').

    inputs/targets: (B, C).  Narrow dtypes (bf16 logits, bf16/int8 targets)
    are accepted and upcast to f32 inside the kernel after the DMA.
    """
    # TODO(synk): reduction='none' (per-element output) is not emitted here.
    B, C = inputs.shape
    if pos_weight is None:
        pos_weight = jnp.ones((C,), dtype=jnp.float32)
    pw2d = jnp.asarray(pos_weight, jnp.float32).reshape(1, C)

    # Sublane-packing granularity of the (possibly narrow) input dtypes.
    mult = max(_sublane_multiple(inputs.dtype), _sublane_multiple(targets.dtype))

    # VMEM-budget-aware tile: keep 2 inputs x 2 pipeline buffers under ~24 MiB
    # (fits the 32 MiB scoped limit requested below on v5e/v6e/v7x).
    in_bytes_per_row = 2 * C * (jnp.dtype(inputs.dtype).itemsize +
                                jnp.dtype(targets.dtype).itemsize)
    budget = 24 * 1024 * 1024
    cap = (budget // max(1, in_bytes_per_row)) // mult * mult
    cap = max(mult, min(cap, 4096))

    if tile_rows is None:
        desired = -(-B // 4)                # aim for >= 4 blocks (DMA overlap)
    else:
        desired = int(tile_rows)
    tile = max(mult, desired)
    tile = -(-tile // mult) * mult          # round up to packing multiple
    tile = min(tile, cap)

    num_blocks = pl.cdiv(B, tile)
    need_mask = (B % tile) != 0             # static; full-divide case skips mask

    kernel = functools.partial(
        _focal_loss_kernel, n_rows=B, tile_rows=tile, gamma=float(gamma),
        need_mask=need_mask)

    partial_sums = pl.pallas_call(
        kernel,
        out_shape=jax.ShapeDtypeStruct((num_blocks * 8, C), jnp.float32),
        grid_spec=pltpu.PrefetchScalarGridSpec(
            num_scalar_prefetch=0,
            grid=(num_blocks,),
            in_specs=[
                pl.BlockSpec((tile, C), lambda i: (i, 0)),
                pl.BlockSpec((tile, C), lambda i: (i, 0)),
                pl.BlockSpec((1, C), lambda i: (0, 0)),
            ],
            out_specs=pl.BlockSpec((8, C), lambda i: (i, 0)),
        ),
        compiler_params=pltpu.CompilerParams(
            dimension_semantics=("parallel",),
            vmem_limit_bytes=32 * 1024 * 1024),
    )(inputs, targets, pw2d)

    total = jnp.sum(partial_sums)
    if reduction == "sum":
        return total
    return total / jnp.float32(B * C)       # 'mean'


def focal_loss_ref(inputs, targets, pos_weight, gamma=GAMMA):
    """Pure-JAX reference mirroring the PyTorch module (with its eps)."""
    x = inputs.astype(jnp.float32)
    t = targets.astype(jnp.float32)
    pw = pos_weight.reshape(1, -1).astype(jnp.float32)
    sp_pos = jnp.maximum(x, 0.0) + jnp.log1p(jnp.exp(-jnp.abs(x)))   # softplus(x)
    sp_neg = jnp.maximum(-x, 0.0) + jnp.log1p(jnp.exp(-jnp.abs(x)))  # softplus(-x)
    bce = pw * t * sp_neg + (1.0 - t) * sp_pos
    probs = jax.nn.sigmoid(x)
    pt = jnp.where(t == 1.0, probs, 1.0 - probs)
    loss = ((1.0 - pt + EPS) ** gamma) * bce
    return loss.mean()


if __name__ == "__main__":
    key = jax.random.PRNGKey(0)
    k1, k2, k3 = jax.random.split(key, 3)

    # Small multi-label shapes: batch not a multiple of the tile to exercise
    # the ragged-last-block mask, num_classes = 128 (one lane tile).
    B, C = 13, 128
    inputs = jax.random.normal(k1, (B, C), dtype=jnp.float32) * 2.0        # logits
    targets = (jax.random.uniform(k2, (B, C)) > 0.7).astype(jnp.float32)   # multi-hot
    pos_weight = 0.5 + jax.random.uniform(k3, (C,), dtype=jnp.float32)     # per-class

    ref = focal_loss_ref(inputs, targets, pos_weight)

    # Default tile derivation (2 blocks of 8 rows for B=13 -> masked last block).
    out = jax.block_until_ready(focal_loss(inputs, targets, pos_weight))
    assert jnp.allclose(out, ref, rtol=1e-5, atol=1e-6), (out, ref)

    # Explicit small tile: multiple grid blocks + remainder masking.
    out_multi = jax.block_until_ready(
        focal_loss(inputs, targets, pos_weight, tile_rows=8))
    assert jnp.allclose(out_multi, ref, rtol=1e-5, atol=1e-6), (out_multi, ref)

    # Narrow input dtypes (bf16 logits/targets): exercises the 16-row packing
    # multiple; reference is computed from the same bf16 values.
    inputs_bf16 = inputs.astype(jnp.bfloat16)
    targets_bf16 = targets.astype(jnp.bfloat16)
    ref_bf16 = focal_loss_ref(inputs_bf16, targets_bf16, pos_weight)
    out_bf16 = jax.block_until_ready(
        focal_loss(inputs_bf16, targets_bf16, pos_weight))
    assert jnp.allclose(out_bf16, ref_bf16, rtol=1e-5, atol=1e-6), (out_bf16, ref_bf16)

    print("KERNEL_OK")
</pallas_src>

<mosaic_0001>
module attributes {stable_mosaic.version = 11 : i64} {
  func.func @_focal_loss_kernel(%arg0: i32, %arg1: memref<8x128xf32, #tpu.memory_space<vmem>>, %arg2: memref<8x128xf32, #tpu.memory_space<vmem>>, %arg3: memref<1x128xf32, #tpu.memory_space<vmem>>, %arg4: memref<8x128xf32, #tpu.memory_space<vmem>>) attributes {dimension_semantics = [#tpu.dimension_semantics<parallel>], iteration_bounds = array<i64: 2>, scalar_prefetch = 0 : i64, scratch_operands = 0 : i64, tpu.core_type = #tpu.core_type<tc>, window_params = [{transform_indices = @transform_0, window_bounds = array<i64: 8, 128>}, {transform_indices = @transform_1, window_bounds = array<i64: 8, 128>}, {pipeline_mode = #tpu.pipeline_mode<synchronous>, transform_indices = @transform_2, window_bounds = array<i64: 1, 128>}, {transform_indices = @transform_3, window_bounds = array<i64: 8, 128>}]} {
    %c0 = arith.constant 0 : index
    %c0_0 = arith.constant 0 : index
    %0 = vector.load %arg1[%c0, %c0_0] : memref<8x128xf32, #tpu.memory_space<vmem>>, vector<8x128xf32>
    %c0_1 = arith.constant 0 : index
    %c0_2 = arith.constant 0 : index
    %1 = vector.load %arg2[%c0_1, %c0_2] : memref<8x128xf32, #tpu.memory_space<vmem>>, vector<8x128xf32>
    %c0_3 = arith.constant 0 : index
    %c0_4 = arith.constant 0 : index
    %2 = vector.load %arg3[%c0_3, %c0_4] : memref<1x128xf32, #tpu.memory_space<vmem>>, vector<1x128xf32>
    %cst = arith.constant 0.000000e+00 : f32
    %3 = vector.broadcast %cst : f32 to vector<8x128xf32>
    %4 = arith.maximumf %0, %3 : vector<8x128xf32>
    %5 = math.absf %0 : vector<8x128xf32>
    %cst_5 = arith.constant 0.000000e+00 : f32
    %6 = vector.broadcast %cst_5 : f32 to vector<8x128xf32>
    %7 = arith.subf %6, %5 : vector<8x128xf32>
    %8 = math.exp %7 : vector<8x128xf32>
    %9 = math.log1p %8 : vector<8x128xf32>
    %10 = arith.addf %4, %9 : vector<8x128xf32>
    %cst_6 = arith.constant 1.000000e+00 : f32
    %11 = vector.broadcast %cst_6 : f32 to vector<8x128xf32>
    %12 = arith.subf %11, %1 : vector<8x128xf32>
    %13 = arith.subf %10, %0 : vector<8x128xf32>
    %14 = arith.mulf %1, %13 : vector<8x128xf32>
    %15 = vector.broadcast %2 : vector<1x128xf32> to vector<8x128xf32>
    %16 = arith.mulf %15, %14 : vector<8x128xf32>
    %17 = arith.mulf %12, %10 : vector<8x128xf32>
    %18 = arith.addf %16, %17 : vector<8x128xf32>
    %19 = arith.mulf %12, %0 : vector<8x128xf32>
    %20 = arith.subf %19, %10 : vector<8x128xf32>
    %cst_7 = arith.constant 2.000000e+00 : f32
    %21 = vector.broadcast %cst_7 : f32 to vector<8x128xf32>
    %22 = arith.mulf %21, %20 : vector<8x128xf32>
    %23 = math.exp %22 : vector<8x128xf32>
    %24 = arith.mulf %23, %18 : vector<8x128xf32>
    %c1_i32 = arith.constant 1 : i32
    %25 = arith.cmpi ne, %arg0, %c1_i32 : i32
    %26 = arith.extui %25 : i1 to i32
    %c0_i32 = arith.constant 0 : i32
    %27 = arith.cmpi ne, %26, %c0_i32 : i32
    scf.if %27 {
      %31 = vector.shape_cast %24 : vector<8x128xf32> to vector<1x8x128xf32>
      %cst_10 = arith.constant dense<0.000000e+00> : vector<8x128xf32>
      %32 = vector.multi_reduction <add>, %31, %cst_10 [0] : vector<1x8x128xf32> to vector<8x128xf32>
      %c0_11 = arith.constant 0 : index
      %c0_12 = arith.constant 0 : index
      %33 = vector.load %arg4[%c0_11, %c0_12] : memref<8x128xf32, #tpu.memory_space<vmem>>, vector<8x128xf32>
      tpu.vector_store %arg4[%c0_11, %c0_12], %32 {strides = array<i32>} : memref<8x128xf32, #tpu.memory_space<vmem>>, vector<8x128xf32>,
    } else {
    }
    %c1_i32_8 = arith.constant 1 : i32
    %28 = arith.cmpi eq, %arg0, %c1_i32_8 : i32
    %29 = arith.extui %28 : i1 to i32
    %c0_i32_9 = arith.constant 0 : i32
    %30 = arith.cmpi ne, %29, %c0_i32_9 : i32
    scf.if %30 {
      %c8_i32 = arith.constant 8 : i32
      %31 = arith.muli %arg0, %c8_i32 : i32
      %32 = tpu.iota {dimensions = array<i32: 0>} : vector<8x128xi32>
      %33 = vector.broadcast %31 : i32 to vector<8x128xi32>
      %34 = arith.addi %33, %32 : vector<8x128xi32>
      %c13_i32 = arith.constant 13 : i32
      %35 = vector.broadcast %c13_i32 : i32 to vector<8x128xi32>
      %36 = arith.cmpi slt, %34, %35 : vector<8x128xi32>
      %cst_10 = arith.constant 0.000000e+00 : f32
      %37 = vector.broadcast %cst_10 : f32 to vector<8x128xf32>
      %38 = arith.select %36, %24, %37 : vector<8x128xi1>, vector<8x128xf32>
      %39 = vector.shape_cast %38 : vector<8x128xf32> to vector<1x8x128xf32>
      %cst_11 = arith.constant dense<0.000000e+00> : vector<8x128xf32>
      %40 = vector.multi_reduction <add>, %39, %cst_11 [0] : vector<1x8x128xf32> to vector<8x128xf32>
      %c0_12 = arith.constant 0 : index
      %c0_13 = arith.constant 0 : index
      %41 = vector.load %arg4[%c0_12, %c0_13] : memref<8x128xf32, #tpu.memory_space<vmem>>, vector<8x128xf32>
      tpu.vector_store %arg4[%c0_12, %c0_13], %40 {strides = array<i32>} : memref<8x128xf32, #tpu.memory_space<vmem>>, vector<8x128xf32>,
    } else {
    }
    return
  }
  func.func @transform_0(%arg0: i32) -> (i32, i32) {
    %c0_i32 = arith.constant 0 : i32
    %c0_i32_0 = arith.constant 0 : i32
    return %arg0, %c0_i32 : i32, i32
  }
  func.func @transform_1(%arg0: i32) -> (i32, i32) {
    %c0_i32 = arith.constant 0 : i32
    %c0_i32_0 = arith.constant 0 : i32
    return %arg0, %c0_i32 : i32, i32
  }
  func.func @transform_2(%arg0: i32) -> (i32, i32) {
    %c0_i32 = arith.constant 0 : i32
    %c0_i32_0 = arith.constant 0 : i32
    %c0_i32_1 = arith.constant 0 : i32
    return %c0_i32, %c0_i32_0 : i32, i32
  }
  func.func @transform_3(%arg0: i32) -> (i32, i32) {
    %c0_i32 = arith.constant 0 : i32
    %c0_i32_0 = arith.constant 0 : i32
    return %arg0, %c0_i32 : i32, i32
  }
}

</mosaic_0001>

<llo_original>
// kernel: tpu_custom_call.1
$region0: #{tpu_custom_call.1}
  #allocation0 [shape = 'u32[]', space=smem, size = 0x4, offset = 0x4, fixed_abs, tag = 'smem constant byte address 0x4 - core index']
  #allocation1 [shape = 'u32[144,128]{1,0:T(1,128)}', space=vmem, size = 0x12000, scoped, tag = 'internal scratch']
  %s0 = inlined_call_operand.hbm [shape: f32[13,128], index: 0, kind: input, shape index: {}]
  %s1 = inlined_call_operand.hbm [shape: f32[13,128], index: 1, kind: input, shape index: {}]
  %s2 = inlined_call_operand.vmem [shape: f32[1,128], index: 2, kind: input, shape index: {}]
  %s3 = inlined_call_operand.hbm [shape: f32[16,128], index: 3, kind: output, shape index: {}]
  %s4 = sld [smem:[#allocation0]]
  $region61: #{tpu_custom_call.1} parent=0
    _
  %s6 = ssub.s32 1, %s4
  %s7 = scalar_select 0, %s6, %s4
  $region1: #{tpu_custom_call.1} parent=0
    #allocation2 [shape = 'u8[8192]{0}', space=vmem, size = 0x2000, scoped, tag = 'input window, operand 0']
    #allocation3 [shape = 's32[2]{0}', space=sflag, size = 0x8, scoped, tag = 'scoped memory for tpu_custom_call.1']
    #allocation4 [shape = 's32[2]{0}', space=sflag, size = 0x8, scoped, tag = 'scoped memory for tpu_custom_call.1']
    #allocation5 [shape = 'u8[8192]{0}', space=vmem, size = 0x2000, scoped, tag = 'input window, operand 1']
    #allocation6 [shape = 's32[2]{0}', space=sflag, size = 0x8, scoped, tag = 'scoped memory for tpu_custom_call.1']
    #allocation7 [shape = 'u8[8192]{0}', space=vmem, size = 0x2000, scoped, tag = 'output window, operand 0']
    %8 = vsyncpa [#allocation3], 0
    %s9 = scalar_lea.sflag [#allocation3], 1
    %10 = vsyncpa %s9, 0
    %11 = vsyncpa [#allocation6], 0
    %s12 = scalar_lea.sflag [#allocation6], 1
    %13 = vsyncpa %s12, 0
    %14 = vsyncpa [#allocation4], 0
    %s15 = scalar_lea.sflag [#allocation4], 1
    %16 = vsyncpa %s15, 0
    loop: start=0, step=1, limit=4
    $region2: #{tpu_custom_call.1} parent=1 // loop_pre_header
      _
    $region3: #{tpu_custom_call.1} parent=1 // loop_header
      %s18 = sphi 0, %s22
      %p19 = scmp.ge.s32.totalorder %s18, 4
      %s28 = sphi 0, %s30
      %s31 = sphi 0, %s28
      %s32 = sphi 0, %s31
      %s48 = sphi 0, %s32
      %s54 = sphi 0, %s56
      %s57 = sphi 0, %s54
      %s58 = sphi 0, %s57
      %s74 = sphi 0, %s58
      %s78 = sphi 0, %s78
      %s80 = sphi 0, %s78
      %s81 = sphi 0, %s80
      %s95 = sphi 0, %s81
      %s101 = sphi 0, %s103
      %s104 = sphi 0, %s101
      %s105 = sphi 0, %s104
      %s121 = sphi 0, %s105
    $region4: #{tpu_custom_call.1} parent=1 // loop_header_branch
      %21 = sbr.rel (%p19) target = $region8
    $region5: #{tpu_custom_call.1} parent=1 // loop_body
      %s23 = ssub.s32 %s18, 1
      %s24 = ssub.s32 %s18, 2
      %s25 = sadd.s32 %s18, 1
      %s26 = ssub.s32 %s18, %s25
      %p27 = scmp.eq.s32.totalorder %s26, 0
      %s29 = sadd.s32 %s28, 1
      %s30 = scalar_select %p27, %s28, %s29
      %p33 = pneg %p27
      %p34 = scmp.eq.s32.totalorder %s18, 1
      %p35 = por %p33, %p34
      %p36 = scmp.ne.s32.totalorder %s28, %s31
      %p37 = scmp.eq.s32.totalorder %s18, 0
      %p38 = por %p36, %p37
      %p39 = scmp.ne.s32.totalorder %s28, %s31
      %p40 = scmp.eq.s32.totalorder %s23, 1
      %p41 = por %p39, %p40
      %p42 = scmp.ne.s32.totalorder %s31, %s32
      %p43 = scmp.eq.s32.totalorder %s23, 0
      %p44 = por %p42, %p43
      %p45 = scmp.ne.s32.totalorder %s31, %s32
      %p46 = scmp.eq.s32.totalorder %s24, 1
      %p47 = por %p45, %p46
      %p49 = scmp.ne.s32.totalorder %s32, %s48
      %p50 = scmp.eq.s32.totalorder %s24, 0
      %p51 = por %p49, %p50
      %s52 = ssub.s32 %s18, %s25
      %p53 = scmp.eq.s32.totalorder %s52, 0
      %s55 = sadd.s32 %s54, 1
      %s56 = scalar_select %p53, %s54, %s55
      %p59 = pneg %p53
      %p60 = scmp.eq.s32.totalorder %s18, 1
      %p61 = por %p59, %p60
      %p62 = scmp.ne.s32.totalorder %s54, %s57
      %p63 = scmp.eq.s32.totalorder %s18, 0
      %p64 = por %p62, %p63
      %p65 = scmp.ne.s32.totalorder %s54, %s57
      %p66 = scmp.eq.s32.totalorder %s23, 1
      %p67 = por %p65, %p66
      %p68 = scmp.ne.s32.totalorder %s57, %s58
      %p69 = scmp.eq.s32.totalorder %s23, 0
      %p70 = por %p68, %p69
      %p71 = scmp.ne.s32.totalorder %s57, %s58
      %p72 = scmp.eq.s32.totalorder %s24, 1
      %p73 = por %p71, %p72
      %p75 = scmp.ne.s32.totalorder %s58, %s74
      %p76 = scmp.eq.s32.totalorder %s24, 0
      %p77 = por %p75, %p76
      %s79 = sadd.s32 %s78, 1
      %p82 = scmp.eq.s32.totalorder %s18, 1
      %p83 = scmp.ne.s32.totalorder %s78, %s80
      %p84 = scmp.eq.s32.totalorder %s18, 0
      %p85 = por %p83, %p84
      %p86 = scmp.ne.s32.totalorder %s78, %s80
      %p87 = scmp.eq.s32.totalorder %s23, 1
      %p88 = por %p86, %p87
      %p89 = scmp.ne.s32.totalorder %s80, %s81
      %p90 = scmp.eq.s32.totalorder %s23, 0
      %p91 = por %p89, %p90
      %p92 = scmp.ne.s32.totalorder %s80, %s81
      %p93 = scmp.eq.s32.totalorder %s24, 1
      %p94 = por %p92, %p93
      %p96 = scmp.ne.s32.totalorder %s81, %s95
      %p97 = scmp.eq.s32.totalorder %s24, 0
      %p98 = por %p96, %p97
      %s99 = ssub.s32 %s18, %s25
      %p100 = scmp.eq.s32.totalorder %s99, 0
      %s102 = sadd.s32 %s101, 1
      %s103 = scalar_select %p100, %s101, %s102
      %p106 = pneg %p100
      %p107 = scmp.eq.s32.totalorder %s18, 1
      %p108 = por %p106, %p107
      %p109 = scmp.ne.s32.totalorder %s101, %s104
      %p110 = scmp.eq.s32.totalorder %s18, 0
      %p111 = por %p109, %p110
      %p112 = scmp.ne.s32.totalorder %s101, %s104
      %p113 = scmp.eq.s32.totalorder %s23, 1
      %p114 = por %p112, %p113
      %p115 = scmp.ne.s32.totalorder %s104, %s105
      %p116 = scmp.eq.s32.totalorder %s23, 0
      %p117 = por %p115, %p116
      %p118 = scmp.ne.s32.totalorder %s104, %s105
      %p119 = scmp.eq.s32.totalorder %s24, 1
      %p120 = por %p118, %p119
      %p122 = scmp.ne.s32.totalorder %s105, %s121
      %p123 = scmp.eq.s32.totalorder %s24, 0
      %p124 = por %p122, %p123
      %p125 = scmp.le.s32.totalorder 1, %s18
      %p126 = scmp.lt.s32.totalorder %s18, 3
      %p127 = pnand %p125, %p126
      %p128 = pneg %p127
      // Predicated region
      $region9: #{tpu_custom_call.1} parent=5 // pred_check
        _
      $region10: #{tpu_custom_call.1} parent=5 // pred_check_branch
        %130 = sbr.rel (%p127) target = $region12
      $region11: #{tpu_custom_call.1} parent=5 // pred_region
        %s131 = ssub.s32 %s18, 1
        // Predicated region
        $region13: #{tpu_custom_call.1} parent=11 // pred_check
          %p132 = pneg %p91
        $region14: #{tpu_custom_call.1} parent=11 // pred_check_branch
          %134 = sbr.rel (%p132) target = $region16
        $region15: #{tpu_custom_call.1} parent=11 // pred_region
          _
        $region16: #{tpu_custom_call.1} parent=11 // pred_fallthru
          _
      $region12: #{tpu_custom_call.1} parent=5 // pred_fallthru
        _
      %p135 = scmp.lt.s32.totalorder %s18, 2
      // Predicated region
      $region17: #{tpu_custom_call.1} parent=5 // pred_check
        %p136 = pneg %p135
      $region18: #{tpu_custom_call.1} parent=5 // pred_check_branch
        %138 = sbr.rel (%p136) target = $region20
      $region19: #{tpu_custom_call.1} parent=5 // pred_region
        // Predicated region
        $region21: #{tpu_custom_call.1} parent=19 // pred_check
          %p139 = pneg %p38
        $region22: #{tpu_custom_call.1} parent=19 // pred_check_branch
          %141 = sbr.rel (%p139) target = $region24
        $region23: #{tpu_custom_call.1} parent=19 // pred_region
          %s142 = sand.u32 %s28, 1
          %s143 = scalar_lea.sflag [#allocation3], %s142
          %s144 = sand.u32 %s28, 1
          %s145 = smul.addr %s144, 8
          %s146 = scalar_lea.vmem [#allocation2], %s145
          %s148 = ssub.s32 128, 128
          %149 = vsyncadd %s143, %s148
          %s150 = smul.addr %s18, 128
          %s151 = scalar_lea.hbm %s0, %s150
          %s153 = sshll.u32 %s146, 4
          %s154 = int_to_ptr.vmem [resolvable:$true] %s153
          %156 = dma.hbm_to_vmem [thread:$0]  %s151, 128, %s154, %s143
        $region24: #{tpu_custom_call.1} parent=19 // pred_fallthru
          _
        // Predicated region
        $region25: #{tpu_custom_call.1} parent=19 // pred_check
          %p157 = pneg %p64
        $region26: #{tpu_custom_call.1} parent=19 // pred_check_branch
          %159 = sbr.rel (%p157) target = $region28
        $region27: #{tpu_custom_call.1} parent=19 // pred_region
          %s160 = sand.u32 %s54, 1
          %s161 = scalar_lea.sflag [#allocation6], %s160
          %s162 = sand.u32 %s54, 1
          %s163 = smul.addr %s162, 8
          %s164 = scalar_lea.vmem [#allocation5], %s163
          %s166 = ssub.s32 128, 128
          %167 = vsyncadd %s161, %s166
          %s168 = smul.addr %s18, 128
          %s169 = scalar_lea.hbm %s1, %s168
          %s171 = sshll.u32 %s164, 4
          %s172 = int_to_ptr.vmem [resolvable:$true] %s171
          %174 = dma.hbm_to_vmem [thread:$0]  %s169, 128, %s172, %s161
        $region28: #{tpu_custom_call.1} parent=19 // pred_fallthru
          _
      $region20: #{tpu_custom_call.1} parent=5 // pred_fallthru
        _
      %p175 = scmp.le.s32.totalorder 1, %s18
      %p176 = scmp.lt.s32.totalorder %s18, 3
      %p177 = pnand %p175, %p176
      %p178 = pneg %p177
      // Predicated region
      $region29: #{tpu_custom_call.1} parent=5 // pred_check
        _
      $region30: #{tpu_custom_call.1} parent=5 // pred_check_branch
        %180 = sbr.rel (%p177) target = $region32
      $region31: #{tpu_custom_call.1} parent=5 // pred_region
        %s181 = ssub.s32 %s18, 1
        %s182 = sand.u32 %s31, 1
        %s183 = scalar_lea.sflag [#allocation3], %s182
        %s184 = sand.u32 %s31, 1
        %s185 = smul.addr %s184, 8
        %s186 = scalar_lea.vmem [#allocation2], %s185
        // Predicated region
        $region33: #{tpu_custom_call.1} parent=31 // pred_check
          %p187 = pneg %p44
        $region34: #{tpu_custom_call.1} parent=31 // pred_check_branch
          %189 = sbr.rel (%p187) target = $region36
        $region35: #{tpu_custom_call.1} parent=31 // pred_region
          %190 = dma.done %s183, 128
        $region36: #{tpu_custom_call.1} parent=31 // pred_fallthru
          _
        %s191 = sand.u32 %s57, 1
        %s192 = scalar_lea.sflag [#allocation6], %s191
        %s193 = sand.u32 %s57, 1
        %s194 = smul.addr %s193, 8
        %s195 = scalar_lea.vmem [#allocation5], %s194
        // Predicated region
        $region37: #{tpu_custom_call.1} parent=31 // pred_check
          %p196 = pneg %p70
        $region38: #{tpu_custom_call.1} parent=31 // pred_check_branch
          %198 = sbr.rel (%p196) target = $region40
        $region39: #{tpu_custom_call.1} parent=31 // pred_region
          %199 = dma.done %s192, 128
        $region40: #{tpu_custom_call.1} parent=31 // pred_fallthru
          _
        %s200 = sand.u32 %s31, 1
        %s201 = scalar_lea.sflag [#allocation3], %s200
        %s202 = sand.u32 %s31, 1
        %s203 = smul.addr %s202, 8
        %s204 = scalar_lea.vmem [#allocation2], %s203
        %p205 = pneg %p44
        %p206 = pneg %p41
        %s207 = sand.u32 %s57, 1
        %s208 = scalar_lea.sflag [#allocation6], %s207
        %s209 = sand.u32 %s57, 1
        %s210 = smul.addr %s209, 8
        %s211 = scalar_lea.vmem [#allocation5], %s210
        %p212 = pneg %p70
        %p213 = pneg %p67
        %p214 = pneg %p91
        %p215 = pneg %p88
        %p216 = pneg %p117
        %p217 = pneg %p114
        %s218 = sand.u32 %s104, 1
        %s219 = scalar_lea.sflag [#allocation4], %s218
        %s220 = sand.u32 %s104, 1
        %s221 = smul.addr %s220, 8
        %s222 = scalar_lea.vmem [#allocation7], %s221
        %v223 = vld [vmem:[%s186] sm:$0xff]
        %v224 = vld [vmem:[%s195] sm:$0xff]
        %v225 = vld [vmem:[%s2] sm:$0x1]
        %v226 = vmax.f32 %v223, 0.0
        %v227 = vand.u32 2147483647, %v223
        %v228 = vsub.f32 0.0, %v227
        %v229 = vmul.f32 %v228, 1.442695
        %v230 = vpow.pop %v229
        %v231 = vadd.f32 %v230, 1.0
        %v232 = vlog2.pop %v231
        %v233 = vmul.f32 %v232, 0.6931472
        %v234 = vmul.f32 -0.5, %v230
        %v235 = vadd.f32 %v234, 1.0
        %v236 = vmul.f32 %v235, %v230
        %v237 = vand.u32 2147483647, %v230
        %vm238 = vcmp.lt.f32.partialorder %v237, 0.0004427343
        %v239 = vsel %vm238, %v236, %v233
        %v240 = vadd.f32 %v226, %v239
        %v241 = vsub.f32 1.0, %v224
        %v242 = vsub.f32 %v240, %v223
        %v243 = vmul.f32 %v224, %v242
        %v245 = vlaneseq
        %v246 = vshrl.u32 %v245, 7
        %v247 = vsub.s32 0, %v246
        %v248 = vrot.slane %v225, %v247
        %v250 = vmul.f32 %v248, %v243
        %v251 = vmul.f32 %v241, %v240
        %v252 = vadd.f32 %v250, %v251
        %v253 = vmul.f32 %v241, %v223
        %v254 = vsub.f32 %v253, %v240
        %v255 = vmul.f32 %v254, 2.0
        %v256 = vmul.f32 %v255, 1.442695
        %v257 = vpow.pop %v256
        %v258 = vmul.f32 %v257, %v252
        %p259 = scmp.ne.s32.totalorder %s23, 1
        // Predicated region
        $region41: #{tpu_custom_call.1} parent=31 // pred_check
          %p260 = pneg %p259
        $region42: #{tpu_custom_call.1} parent=31 // pred_check_branch
          %262 = sbr.rel (%p260) target = $region44
        $region43: #{tpu_custom_call.1} parent=31 // pred_region
          %v263 = vadd.f32 %v258, 0.0
          %264 = vst [vmem:[%s222] sm:$0xff] %v263
        $region44: #{tpu_custom_call.1} parent=31 // pred_fallthru
          _
        %p265 = scmp.eq.s32.totalorder %s23, 1
        // Predicated region
        $region45: #{tpu_custom_call.1} parent=31 // pred_check
          %p266 = pneg %p265
        $region46: #{tpu_custom_call.1} parent=31 // pred_check_branch
          %268 = sbr.rel (%p266) target = $region48
        $region47: #{tpu_custom_call.1} parent=31 // pred_region
          %s269 = smul.u32 %s23, 8
          %v270 = vlaneseq
          %v271 = vshrl.u32 %v270, 7
          %v272 = vstv %s269
          %v273 = vadd.s32 %v272, %v271
          %vm274 = vcmp.lt.s32.totalorder %v273, 13
          %v275 = vsel %vm274, %v258, 0.0
          %v276 = vadd.f32 %v275, 0.0
          %277 = vst [vmem:[%s222] sm:$0xff] %v276
        $region48: #{tpu_custom_call.1} parent=31 // pred_fallthru
          _
        %s278 = sand.u32 %s104, 1
        %s279 = scalar_lea.sflag [#allocation4], %s278
        %s280 = sand.u32 %s104, 1
        %s281 = smul.addr %s280, 8
        %s282 = scalar_lea.vmem [#allocation7], %s281
        // Predicated region
        $region49: #{tpu_custom_call.1} parent=31 // pred_check
          %p283 = pneg %p114
        $region50: #{tpu_custom_call.1} parent=31 // pred_check_branch
          %285 = sbr.rel (%p283) target = $region52
        $region51: #{tpu_custom_call.1} parent=31 // pred_region
          %s287 = ssub.s32 128, 128
          %288 = vsyncadd %s279, %s287
          %s289 = smul.addr %s23, 128
          %s290 = scalar_lea.hbm %s3, %s289
          %s292 = sshll.u32 %s282, 4
          %s293 = int_to_ptr.vmem [resolvable:$true] %s292
          %295 = dma.vmem_to_hbm [thread:$0]  %s293, 128, %s290, %s279
        $region52: #{tpu_custom_call.1} parent=31 // pred_fallthru
          _
      $region32: #{tpu_custom_call.1} parent=5 // pred_fallthru
        _
      %p296 = scmp.le.s32.totalorder 2, %s18
      // Predicated region
      $region53: #{tpu_custom_call.1} parent=5 // pred_check
        %p297 = pneg %p296
      $region54: #{tpu_custom_call.1} parent=5 // pred_check_branch
        %299 = sbr.rel (%p297) target = $region56
      $region55: #{tpu_custom_call.1} parent=5 // pred_region
        %s300 = ssub.s32 %s18, 2
        // Predicated region
        $region57: #{tpu_custom_call.1} parent=55 // pred_check
          %p301 = pneg %p120
        $region58: #{tpu_custom_call.1} parent=55 // pred_check_branch
          %303 = sbr.rel (%p301) target = $region60
        $region59: #{tpu_custom_call.1} parent=55 // pred_region
          %s304 = sand.u32 %s105, 1
          %s305 = scalar_lea.sflag [#allocation4], %s304
          %s306 = sand.u32 %s105, 1
          %s307 = smul.addr %s306, 8
          %s308 = scalar_lea.vmem [#allocation7], %s307
          %309 = dma.done %s305, 128
        $region60: #{tpu_custom_call.1} parent=55 // pred_fallthru
          _
      $region56: #{tpu_custom_call.1} parent=5 // pred_fallthru
        _
    $region6: #{tpu_custom_call.1} parent=1 // loop_footer
      %s22 = sadd.s32 1, %s18
    $region7: #{tpu_custom_call.1} parent=1 // loop_footer_branch
      %17 = sbr.rel target = $region3
    $region8: #{tpu_custom_call.1} parent=1 // loop_exit
      _
    %310 = vsyncpa [#allocation3], 1
    %s311 = scalar_lea.sflag [#allocation3], 1
    %312 = vsyncpa %s311, 1
    %313 = vsyncpa [#allocation6], 1
    %s314 = scalar_lea.sflag [#allocation6], 1
    %315 = vsyncpa %s314, 1
    %316 = vsyncpa [#allocation4], 1
    %s317 = scalar_lea.sflag [#allocation4], 1
    %318 = vsyncpa %s317, 1

</llo_original>
